<compile_context>
chip_gen: v7x
topology: tpu7x:2x2x1
jax: 0.10.0
libtpu: 0.0.40
codegen_flags: <defaults>
</compile_context>

<pallas_src>
import functools

import jax
import jax.numpy as jnp
from jax.experimental import pallas as pl
from jax.experimental.pallas import tpu as pltpu


_VMEM_LIMIT = 48 * 1024 * 1024  # > scoped defaults, < smallest physical VMEM (v7x 64 MiB)


def _pick_tile(dim, max_tile, multiple):
    """Largest tile <= max_tile that divides `dim` and is a multiple of `multiple`.

    Falls back to the full extent (always a legal TPU block) if no such tile exists
    or if the dimension already fits in one tile.
    """
    if dim <= max_tile:
        return dim
    t = max_tile - (max_tile % multiple)
    while t >= multiple:
        if dim % t == 0:
            return t
        t -= multiple
    return dim


# ----------------------------- LayerNorm -----------------------------------


def _layernorm_kernel(x_ref, g_ref, b_ref, o_ref, *, eps):
    x = x_ref[...].astype(jnp.float32)        # (tr, C)
    g = g_ref[...].astype(jnp.float32)        # (1, C)  lane-dense
    b = b_ref[...].astype(jnp.float32)        # (1, C)
    mu = jnp.mean(x, axis=-1, keepdims=True)
    xc = x - mu
    var = jnp.mean(xc * xc, axis=-1, keepdims=True)
    inv = jax.lax.rsqrt(var + eps)
    o_ref[...] = (xc * inv * g + b).astype(o_ref.dtype)


def layernorm(x2, gamma, beta, eps=1e-5):
    R, C = x2.shape
    tr = _pick_tile(R, 1024, 8)
    return pl.pallas_call(
        functools.partial(_layernorm_kernel, eps=eps),
        out_shape=jax.ShapeDtypeStruct((R, C), x2.dtype),
        grid=(R // tr,),
        in_specs=[
            pl.BlockSpec((tr, C), lambda i: (i, 0)),
            pl.BlockSpec((1, C), lambda i: (0, 0)),
            pl.BlockSpec((1, C), lambda i: (0, 0)),
        ],
        out_specs=pl.BlockSpec((tr, C), lambda i: (i, 0)),
        compiler_params=pltpu.CompilerParams(
            dimension_semantics=("parallel",),
            vmem_limit_bytes=_VMEM_LIMIT),
    )(x2, gamma.reshape(1, C), beta.reshape(1, C))


# ------------------------ Tiled matmul + epilogue ---------------------------


def _make_matmul_kernel(has_bias, has_res, activation):
    def kernel(*refs):
        i = 0
        a_ref = refs[i]; i += 1
        b_ref = refs[i]; i += 1
        bias_ref = None
        res_ref = None
        if has_bias:
            bias_ref = refs[i]; i += 1
        if has_res:
            res_ref = refs[i]; i += 1
        o_ref, acc_ref = refs[i], refs[i + 1]

        k = pl.program_id(2)

        @pl.when(k == 0)
        def _():
            acc_ref[...] = jnp.zeros_like(acc_ref)

        acc_ref[...] += jnp.dot(
            a_ref[...].astype(jnp.float32),
            b_ref[...].astype(jnp.float32),
            preferred_element_type=jnp.float32)

        @pl.when(k == pl.num_programs(2) - 1)
        def _():
            acc = acc_ref[...]
            if has_bias:
                acc = acc + bias_ref[...].astype(jnp.float32)
            if activation == "gelu":
                # TODO(synk): PyTorch nn.GELU() default is the exact erf GELU;
                # tanh-approximate GELU is used here (max abs error ~1e-3).
                acc = jax.nn.gelu(acc, approximate=True)
            if has_res:
                acc = acc + res_ref[...].astype(jnp.float32)
            o_ref[...] = acc.astype(o_ref.dtype)

    return kernel


def matmul(a, b, bias=None, residual=None, activation=None):
    """out = act(a @ b + bias) + residual, as one tiled Pallas kernel."""
    M, K = a.shape
    K2, Np = b.shape
    assert K == K2
    tm = _pick_tile(M, 256, 8)     # sublane axis: multiple of 8 or full extent
    tn = _pick_tile(Np, 512, 128)  # lane axis: multiple of 128 or full extent
    tk = _pick_tile(K, 512, 128)   # lane (A) / sublane (B): multiple of 128 or full

    in_specs = [
        pl.BlockSpec((tm, tk), lambda i, j, k: (i, k)),
        pl.BlockSpec((tk, tn), lambda i, j, k: (k, j)),
    ]
    args = [a, b]
    if bias is not None:
        in_specs.append(pl.BlockSpec((1, tn), lambda i, j, k: (0, j)))
        args.append(bias.reshape(1, Np))
    if residual is not None:
        in_specs.append(pl.BlockSpec((tm, tn), lambda i, j, k: (i, j)))
        args.append(residual)

    return pl.pallas_call(
        _make_matmul_kernel(bias is not None, residual is not None, activation),
        out_shape=jax.ShapeDtypeStruct((M, Np), a.dtype),
        grid=(M // tm, Np // tn, K // tk),
        in_specs=in_specs,
        out_specs=pl.BlockSpec((tm, tn), lambda i, j, k: (i, j)),
        scratch_shapes=[pltpu.VMEM((tm, tn), jnp.float32)],
        compiler_params=pltpu.CompilerParams(
            dimension_semantics=("parallel", "parallel", "arbitrary"),
            vmem_limit_bytes=_VMEM_LIMIT),
    )(*args)


# ------------------------- Multi-head attention -----------------------------


def _attention_kernel(q_ref, k_ref, v_ref, o_ref, *, scale):
    q = q_ref[0].astype(jnp.float32)           # (N, d)
    kk = k_ref[0].astype(jnp.float32)          # (N, d)
    v = v_ref[0].astype(jnp.float32)           # (N, d)
    s = jnp.dot(q, kk.T, preferred_element_type=jnp.float32) * scale   # (N, N)
    m = jnp.max(s, axis=-1, keepdims=True)
    p = jnp.exp(s - m)
    l = jnp.sum(p, axis=-1, keepdims=True)
    attn = p / l
    o = jnp.dot(attn, v, preferred_element_type=jnp.float32)
    o_ref[0] = o.astype(o_ref.dtype)


def attention(q, k, v, scale):
    """q, k, v: (B*H, N, d) -> (B*H, N, d); softmax(q k^T * scale) v per head."""
    BH, N, d = q.shape
    spec = pl.BlockSpec((1, N, d), lambda i: (i, 0, 0))
    return pl.pallas_call(
        functools.partial(_attention_kernel, scale=scale),
        out_shape=jax.ShapeDtypeStruct((BH, N, d), q.dtype),
        grid=(BH,),
        in_specs=[spec, spec, spec],
        out_specs=spec,
        compiler_params=pltpu.CompilerParams(
            dimension_semantics=("parallel",),
            vmem_limit_bytes=_VMEM_LIMIT),
    )(q, k, v)


# ------------------------------ Former block --------------------------------


def former_forward(x, p):
    """x: (B, N, C); parameters use PyTorch Linear layout W: (out, in)."""
    B, N, C = x.shape
    H = C // 32
    d = C // H
    scale = float(d) ** -0.5
    R = B * N

    x2 = x.reshape(R, C)

    # ---- attention branch: x + proj(MHSA(norm1(x))) ----
    h = layernorm(x2, p["ln1_g"], p["ln1_b"])
    qkv = matmul(h, jnp.transpose(p["w_qkv"]))                   # (R, 3C), qkv_bias=False
    qkv = qkv.reshape(B, N, 3, H, d).transpose(2, 0, 3, 1, 4)    # (3, B, H, N, d)
    q = qkv[0].reshape(B * H, N, d)
    k = qkv[1].reshape(B * H, N, d)
    v = qkv[2].reshape(B * H, N, d)
    a = attention(q, k, v, scale)                                # (B*H, N, d)
    a = a.reshape(B, H, N, d).transpose(0, 2, 1, 3).reshape(R, C)
    x2 = matmul(a, jnp.transpose(p["w_proj"]), bias=p["b_proj"], residual=x2)

    # ---- MLP branch: x + fc2(gelu(fc1(norm2(x)))) ----
    h2 = layernorm(x2, p["ln2_g"], p["ln2_b"])
    h2 = matmul(h2, jnp.transpose(p["w_fc1"]), activation="gelu")
    x2 = matmul(h2, jnp.transpose(p["w_fc2"]), residual=x2)

    return x2.reshape(B, N, C)


# ------------------------------ Reference ------------------------------------


def former_reference(x, p):
    B, N, C = x.shape
    H = C // 32
    d = C // H
    scale = float(d) ** -0.5

    def ln(y, g, b, eps=1e-5):
        mu = jnp.mean(y, axis=-1, keepdims=True)
        var = jnp.mean((y - mu) ** 2, axis=-1, keepdims=True)
        return (y - mu) / jnp.sqrt(var + eps) * g + b

    h = ln(x, p["ln1_g"], p["ln1_b"])
    qkv = h @ jnp.transpose(p["w_qkv"])                          # (B, N, 3C)
    qkv = qkv.reshape(B, N, 3, H, d).transpose(2, 0, 3, 1, 4)    # (3, B, H, N, d)
    q, k, v = qkv[0], qkv[1], qkv[2]
    attn = jax.nn.softmax(q @ jnp.swapaxes(k, -2, -1) * scale, axis=-1)
    a = (attn @ v).transpose(0, 2, 1, 3).reshape(B, N, C)
    x = x + a @ jnp.transpose(p["w_proj"]) + p["b_proj"]
    h2 = ln(x, p["ln2_g"], p["ln2_b"])
    h2 = jax.nn.gelu(h2 @ jnp.transpose(p["w_fc1"]), approximate=True)
    x = x + h2 @ jnp.transpose(p["w_fc2"])
    return x


if __name__ == "__main__":
    key = jax.random.PRNGKey(0)
    ks = jax.random.split(key, 10)

    B, N, C = 2, 8, 64          # token_dims=64 -> num_heads=2, head_dim=32
    mlp_ratio = 2
    E = C * mlp_ratio

    x = jax.random.normal(ks[0], (B, N, C), dtype=jnp.float32)
    params = {
        "ln1_g": 1.0 + 0.1 * jax.random.normal(ks[1], (C,), jnp.float32),
        "ln1_b": 0.1 * jax.random.normal(ks[2], (C,), jnp.float32),
        "w_qkv": 0.1 * jax.random.normal(ks[3], (3 * C, C), jnp.float32),  # (out, in)
        "w_proj": 0.1 * jax.random.normal(ks[4], (C, C), jnp.float32),
        "b_proj": 0.1 * jax.random.normal(ks[5], (C,), jnp.float32),
        "ln2_g": 1.0 + 0.1 * jax.random.normal(ks[6], (C,), jnp.float32),
        "ln2_b": 0.1 * jax.random.normal(ks[7], (C,), jnp.float32),
        "w_fc1": 0.1 * jax.random.normal(ks[8], (E, C), jnp.float32),
        "w_fc2": 0.1 * jax.random.normal(ks[9], (C, E), jnp.float32),
    }

    out = former_forward(x, params)
    jax.block_until_ready(out)

    ref = former_reference(x, params)
    err = float(jnp.max(jnp.abs(out - ref)))
    assert jnp.allclose(out, ref, atol=1e-3, rtol=1e-3), err

    print("KERNEL_OK")
</pallas_src>

<mosaic_0001>
module attributes {stable_mosaic.version = 11 : i64} {
  func.func @_layernorm_kernel(%arg0: i32, %arg1: memref<16x64xf32, #tpu.memory_space<vmem>>, %arg2: memref<1x64xf32, #tpu.memory_space<vmem>>, %arg3: memref<1x64xf32, #tpu.memory_space<vmem>>, %arg4: memref<16x64xf32, #tpu.memory_space<vmem>>) attributes {dimension_semantics = [#tpu.dimension_semantics<parallel>], iteration_bounds = array<i64: 1>, scalar_prefetch = 0 : i64, scratch_operands = 0 : i64, tpu.core_type = #tpu.core_type<tc>, window_params = [{transform_indices = @transform_0, window_bounds = array<i64: 16, 64>}, {pipeline_mode = #tpu.pipeline_mode<synchronous>, transform_indices = @transform_1, window_bounds = array<i64: 1, 64>}, {pipeline_mode = #tpu.pipeline_mode<synchronous>, transform_indices = @transform_2, window_bounds = array<i64: 1, 64>}, {transform_indices = @transform_3, window_bounds = array<i64: 16, 64>}]} {
    %c0 = arith.constant 0 : index
    %c0_0 = arith.constant 0 : index
    %0 = vector.load %arg1[%c0, %c0_0] : memref<16x64xf32, #tpu.memory_space<vmem>>, vector<16x64xf32>
    %c0_1 = arith.constant 0 : index
    %c0_2 = arith.constant 0 : index
    %1 = vector.load %arg2[%c0_1, %c0_2] : memref<1x64xf32, #tpu.memory_space<vmem>>, vector<1x64xf32>
    %c0_3 = arith.constant 0 : index
    %c0_4 = arith.constant 0 : index
    %2 = vector.load %arg3[%c0_3, %c0_4] : memref<1x64xf32, #tpu.memory_space<vmem>>, vector<1x64xf32>
    %cst = arith.constant dense<0.000000e+00> : vector<16xf32>
    %3 = vector.multi_reduction <add>, %0, %cst [1] : vector<16x64xf32> to vector<16xf32>
    %4 = vector.shape_cast %3 : vector<16xf32> to vector<16x1xf32>
    %cst_5 = arith.constant 6.400000e+01 : f32
    %5 = vector.broadcast %cst_5 : f32 to vector<16x1xf32>
    %6 = arith.divf %4, %5 : vector<16x1xf32>
    %7 = vector.broadcast %6 : vector<16x1xf32> to vector<16x64xf32>
    %8 = arith.subf %0, %7 : vector<16x64xf32>
    %9 = arith.mulf %8, %8 : vector<16x64xf32>
    %cst_6 = arith.constant dense<0.000000e+00> : vector<16xf32>
    %10 = vector.multi_reduction <add>, %9, %cst_6 [1] : vector<16x64xf32> to vector<16xf32>
    %11 = vector.shape_cast %10 : vector<16xf32> to vector<16x1xf32>
    %cst_7 = arith.constant 6.400000e+01 : f32
    %12 = vector.broadcast %cst_7 : f32 to vector<16x1xf32>
    %13 = arith.divf %11, %12 : vector<16x1xf32>
    %cst_8 = arith.constant 9.99999974E-6 : f32
    %14 = vector.broadcast %cst_8 : f32 to vector<16x1xf32>
    %15 = arith.addf %13, %14 : vector<16x1xf32>
    %16 = math.rsqrt %15 : vector<16x1xf32>
    %17 = vector.broadcast %16 : vector<16x1xf32> to vector<16x64xf32>
    %18 = arith.mulf %8, %17 : vector<16x64xf32>
    %19 = vector.broadcast %1 : vector<1x64xf32> to vector<16x64xf32>
    %20 = arith.mulf %18, %19 : vector<16x64xf32>
    %21 = vector.broadcast %2 : vector<1x64xf32> to vector<16x64xf32>
    %22 = arith.addf %20, %21 : vector<16x64xf32>
    %c0_9 = arith.constant 0 : index
    %c0_10 = arith.constant 0 : index
    %23 = vector.load %arg4[%c0_9, %c0_10] : memref<16x64xf32, #tpu.memory_space<vmem>>, vector<16x64xf32>
    tpu.vector_store %arg4[%c0_9, %c0_10], %22 {strides = array<i32>} : memref<16x64xf32, #tpu.memory_space<vmem>>, vector<16x64xf32>,
    return
  }
  func.func @transform_0(%arg0: i32) -> (i32, i32) {
    %c0_i32 = arith.constant 0 : i32
    %c0_i32_0 = arith.constant 0 : i32
    return %arg0, %c0_i32 : i32, i32
  }
  func.func @transform_1(%arg0: i32) -> (i32, i32) {
    %c0_i32 = arith.constant 0 : i32
    %c0_i32_0 = arith.constant 0 : i32
    %c0_i32_1 = arith.constant 0 : i32
    return %c0_i32, %c0_i32_0 : i32, i32
  }
  func.func @transform_2(%arg0: i32) -> (i32, i32) {
    %c0_i32 = arith.constant 0 : i32
    %c0_i32_0 = arith.constant 0 : i32
    %c0_i32_1 = arith.constant 0 : i32
    return %c0_i32, %c0_i32_0 : i32, i32
  }
  func.func @transform_3(%arg0: i32) -> (i32, i32) {
    %c0_i32 = arith.constant 0 : i32
    %c0_i32_0 = arith.constant 0 : i32
    return %arg0, %c0_i32 : i32, i32
  }
}

</mosaic_0001>

<llo_original>
// kernel: tpu_custom_call.1
$region0: #{tpu_custom_call.1}
  #allocation0 [shape = 'u32[]', space=smem, size = 0x4, offset = 0x4, fixed_abs, tag = 'smem constant byte address 0x4 - core index']
  #allocation1 [shape = 'u32[144,128]{1,0:T(1,128)}', space=vmem, size = 0x12000, scoped, tag = 'internal scratch']
  %s0 = inlined_call_operand.hbm [shape: f32[16,64], index: 0, kind: input, shape index: {}]
  %s1 = inlined_call_operand.vmem [shape: f32[1,64], index: 1, kind: input, shape index: {}]
  %s2 = inlined_call_operand.vmem [shape: f32[1,64], index: 2, kind: input, shape index: {}]
  %s3 = inlined_call_operand.hbm [shape: f32[16,64], index: 3, kind: output, shape index: {}]
  %s4 = sld [smem:[#allocation0]]
  $region26: #{tpu_custom_call.1} parent=0
    _
  %s6 = ssub.s32 1, %s4
  %s7 = scalar_select 0, %s6, %s4
  $region1: #{tpu_custom_call.1} parent=0
    #allocation2 [shape = 'u8[8192]{0}', space=vmem, size = 0x2000, scoped, tag = 'input window, operand 0, single buffered']
    #allocation3 [shape = 's32[1]{0}', space=sflag, size = 0x4, scoped, tag = 'scoped memory for tpu_custom_call.1']
    #allocation4 [shape = 's32[1]{0}', space=sflag, size = 0x4, scoped, tag = 'scoped memory for tpu_custom_call.1']
    #allocation5 [shape = 'u8[8192]{0}', space=vmem, size = 0x2000, scoped, tag = 'output window, operand 0, single buffered']
    %8 = vsyncpa [#allocation3], 0
    %9 = vsyncpa [#allocation4], 0
    // Predicated region
    $region2: #{tpu_custom_call.1} parent=1 // pred_check
      _
    $region3: #{tpu_custom_call.1} parent=1 // pred_check_branch
      %11 = sbr.rel (0) target = $region5
    $region4: #{tpu_custom_call.1} parent=1 // pred_region
      %s13 = ssub.s32 256, 256
      %14 = vsyncadd [#allocation3], %s13
      %s15 = sshll.u32 [#allocation2], 4
      %s16 = int_to_ptr.vmem [resolvable:$true] %s15
      %21 = dma.hbm_to_vmem [thread:$0]  %s0, 256, %s16, [#allocation3], 128, 128, 8
    $region5: #{tpu_custom_call.1} parent=1 // pred_fallthru
      _
    // Predicated region
    $region6: #{tpu_custom_call.1} parent=1 // pred_check
      _
    $region7: #{tpu_custom_call.1} parent=1 // pred_check_branch
      %23 = sbr.rel (0) target = $region9
    $region8: #{tpu_custom_call.1} parent=1 // pred_region
      _
    $region9: #{tpu_custom_call.1} parent=1 // pred_fallthru
      _
    // Predicated region
    $region10: #{tpu_custom_call.1} parent=1 // pred_check
      _
    $region11: #{tpu_custom_call.1} parent=1 // pred_check_branch
      %25 = sbr.rel (0) target = $region13
    $region12: #{tpu_custom_call.1} parent=1 // pred_region
      _
    $region13: #{tpu_custom_call.1} parent=1 // pred_fallthru
      _
    // Predicated region
    $region14: #{tpu_custom_call.1} parent=1 // pred_check
      _
    $region15: #{tpu_custom_call.1} parent=1 // pred_check_branch
      %27 = sbr.rel (0) target = $region17
    $region16: #{tpu_custom_call.1} parent=1 // pred_region
      %28 = dma.done [#allocation3], 256
    $region17: #{tpu_custom_call.1} parent=1 // pred_fallthru
      _
    %v29 = vld [vmem:[#allocation2] sm:$0xff]
    %v30 = vld [vmem:[#allocation2 + $0x8] sm:$0xff]
    %v31 = vld [vmem:[%s1] sm:$0x1]
    %v32 = vld [vmem:[%s2] sm:$0x1]
    %vm33 = vcmask 523264
    %v34 = vsel %vm33, %v29, 0.0
    %35 = vadd.xlane.f32.xlu0 %v34
    %v36 = vpop.xlane.xlu0 %35
    %v37 = vsel %vm33, %v30, 0.0
    %38 = vadd.xlane.f32.xlu0 %v37
    %v39 = vpop.xlane.xlu0 %38
    %v40 = vrcp.pop 64.0
    %v41 = vmul.f32 %v36, %v40
    %v42 = vmul.f32 %v39, %v40
    %v43 = vsub.f32 %v29, %v41
    %v44 = vsub.f32 %v30, %v42
    %v45 = vmul.f32 %v43, %v43
    %v46 = vmul.f32 %v44, %v44
    %v47 = vsel %vm33, %v45, 0.0
    %48 = vadd.xlane.f32.xlu0 %v47
    %v49 = vpop.xlane.xlu0 %48
    %v50 = vsel %vm33, %v46, 0.0
    %51 = vadd.xlane.f32.xlu0 %v50
    %v52 = vpop.xlane.xlu0 %51
    %v53 = vmul.f32 %v49, %v40
    %v54 = vmul.f32 %v52, %v40
    %v55 = vadd.f32 %v53, 1e-05
    %v56 = vadd.f32 %v54, 1e-05
    %v57 = vrsqrt.pop %v55
    %v58 = vrsqrt.pop %v56
    %v59 = vmul.f32 %v43, %v57
    %v60 = vmul.f32 %v44, %v58
    %v62 = vlaneseq
    %v63 = vshrl.u32 %v62, 7
    %v64 = vsub.s32 0, %v63
    %v65 = vrot.slane %v31, %v64
    %v67 = vmul.f32 %v59, %v65
    %v68 = vmul.f32 %v60, %v65
    %v70 = vlaneseq
    %v71 = vshrl.u32 %v70, 7
    %v72 = vsub.s32 0, %v71
    %v73 = vrot.slane %v32, %v72
    %v75 = vadd.f32 %v67, %v73
    %v76 = vadd.f32 %v68, %v73
    %77 = vst.msk [vmem:[#allocation5] sm:$0xff] %vm33, %v75
    %78 = vst.msk [vmem:[#allocation5 + $0x8] sm:$0xff] %vm33, %v76
    // Predicated region
    $region18: #{tpu_custom_call.1} parent=1 // pred_check
      _
    $region19: #{tpu_custom_call.1} parent=1 // pred_check_branch
      %80 = sbr.rel (0) target = $region21
    $region20: #{tpu_custom_call.1} parent=1 // pred_region
      %s82 = ssub.s32 256, 256
      %83 = vsyncadd [#allocation4], %s82
      %s84 = sshll.u32 [#allocation5], 4
      %s85 = int_to_ptr.vmem [resolvable:$true] %s84
      %90 = dma.vmem_to_hbm [thread:$0]  %s85, 256, %s3, [#allocation4], 128, 128, 8
    $region21: #{tpu_custom_call.1} parent=1 // pred_fallthru
      _
    // Predicated region
    $region22: #{tpu_custom_call.1} parent=1 // pred_check
      _
    $region23: #{tpu_custom_call.1} parent=1 // pred_check_branch
      %92 = sbr.rel (0) target = $region25
    $region24: #{tpu_custom_call.1} parent=1 // pred_region
      %93 = dma.done [#allocation4], 256
    $region25: #{tpu_custom_call.1} parent=1 // pred_fallthru
      _
    %94 = vsyncpa [#allocation3], 1
    %95 = vsyncpa [#allocation4], 1

</llo_original>
